<compile_context>
chip_gen: v7x
topology: tpu7x:2x2x1
jax: 0.10.0
libtpu: 0.0.40
codegen_flags: <defaults>
</compile_context>

<pallas_src>
import jax
import jax.numpy as jnp
from jax.experimental import pallas as pl
from jax.experimental.pallas import tpu as pltpu

BN_EPS = 1e-5
LANE = 128
NEG_INF = -1e30


def _round_up(d, m=LANE):
    return ((d + m - 1) // m) * m


def _pad2(a, rows, cols):
    return jnp.pad(a, ((0, rows - a.shape[0]), (0, cols - a.shape[1])))


# ---------------------------------------------------------------------------
# Fused kernel: all SAGE layers in one pallas_call, everything VMEM-resident.
# ---------------------------------------------------------------------------
def _make_fused_kernel(num_layers, out_channels, fout_p):
    def kernel(adj_ref, deg_inv_ref, x_ref, w_ref, b_ref, out_ref):
        adj = adj_ref[...]          # [N, N]      bf16 (0/1 values, exact)
        deg_inv = deg_inv_ref[...]  # [N, P]      f32  (pre-broadcast 1/deg)
        x = x_ref[...]              # [N, P]      bf16

        for layer in range(num_layers):
            wlr = w_ref[layer]                 # [P, 2P] bf16 (wl | wr, BN folded)
            b = b_ref[pl.ds(layer, 1), :]      # [1, P]  f32  (BN folded)

            # One bf16 MXU matmul produces both halves, f32 accumulation:
            #   left half feeds the N^2 aggregation, right half is lin_r(x).
            z = jnp.dot(x, wlr, preferred_element_type=jnp.float32)  # [N, 2P]
            zl = z[:, :fout_p]
            zr = z[:, fout_p:]

            agg = jnp.dot(adj, zl.astype(jnp.bfloat16),
                          preferred_element_type=jnp.float32) * deg_inv
            h = agg + zr + b                   # f32 epilogue

            if layer < num_layers - 1:
                # BN folded into wlr/b; dropout is identity in eval.
                # ReLU + bf16 cast in one go: next layer's matmul operand.
                x = jnp.maximum(h, 0.0).astype(jnp.bfloat16)
            else:
                # Mask padded class lanes, then log_softmax over real classes
                # (kept f32: NEG_INF would overflow bf16).
                col = jax.lax.broadcasted_iota(jnp.int32, h.shape, 1)
                h = jnp.where(col < out_channels, h, NEG_INF)
                m = jnp.max(h, axis=-1, keepdims=True)
                lse = jnp.log(jnp.sum(jnp.exp(h - m), axis=-1, keepdims=True)) + m
                out_ref[...] = h - lse

    return kernel


# ---------------------------------------------------------------------------
# Wrapper: prep (normalize adj, fold BN, pack + pad params) + one pallas_call.
# ---------------------------------------------------------------------------
def sage_forward_pallas(convs, bns, x, adj):
    """Fused eval-mode SAGE forward. convs/bns hold the original (unfolded) params."""
    num_layers = len(convs)
    n = adj.shape[0]
    out_channels = convs[-1][0].shape[1]

    # Common pad width for every feature / hidden / class dim.
    dims = [convs[0][0].shape[0]] + [c[0].shape[1] for c in convs]
    P = max(_round_up(d) for d in dims)

    # One-shot adjacency normalization; deg_inv kept exact in f32 and
    # pre-broadcast to the full lane width (hoisted out of the layer loop).
    deg = jnp.sum(adj, axis=-1, keepdims=True)
    deg_inv = jnp.where(deg > 0.0, 1.0 / deg, 0.0).astype(jnp.float32)
    deg_inv_b = jnp.broadcast_to(deg_inv, (n, P))
    adj_bf16 = adj.astype(jnp.bfloat16)  # 0/1 values: exact in bf16

    # Fold eval-mode BN into conv weights, concat wl|wr, pack into one slab.
    w_layers, b_layers = [], []
    for layer in range(num_layers):
        wl, wr, b = convs[layer]
        if layer < num_layers - 1:
            gamma, beta, mean, var = bns[layer]
            s = gamma * jax.lax.rsqrt(var + BN_EPS)            # [1, fout]
            wl = wl * s
            wr = wr * s
            b = b * s + beta - mean * s
        wlr = jnp.concatenate([_pad2(wl, P, P), _pad2(wr, P, P)], axis=1)
        w_layers.append(wlr.astype(jnp.bfloat16))              # [P, 2P]
        b_layers.append(_pad2(b, 1, P).astype(jnp.float32))    # [1, P]
    w_slab = jnp.stack(w_layers, axis=0)                       # [L, P, 2P] bf16
    b_slab = jnp.concatenate(b_layers, axis=0)                 # [L, P]     f32

    x_pad = _pad2(x, n, P).astype(jnp.bfloat16)

    kernel = _make_fused_kernel(num_layers, out_channels, P)
    vmem_spec = pl.BlockSpec(memory_space=pltpu.MemorySpace.VMEM)
    out = pl.pallas_call(
        kernel,
        out_shape=jax.ShapeDtypeStruct((n, P), jnp.float32),
        in_specs=[vmem_spec] * 5,
        out_specs=vmem_spec,
    )(adj_bf16, deg_inv_b, x_pad, w_slab, b_slab)
    return out[:, :out_channels]


# ---------------------------------------------------------------------------
# Parameter construction (deterministic, synthetic) — original (unfolded) form.
# ---------------------------------------------------------------------------
def init_sage_params(key, in_channels, hidden_channels, out_channels, num_layers):
    dims = [in_channels] + [hidden_channels] * (num_layers - 1) + [out_channels]
    params = {"convs": [], "bns": []}
    for layer in range(num_layers):
        fin, fout = dims[layer], dims[layer + 1]
        key, k1, k2, k3 = jax.random.split(key, 4)
        scale = 1.0 / jnp.sqrt(jnp.float32(fin))
        # Linear weights stored already-transposed as [fin, fout] for x @ W.
        wl = jax.random.uniform(k1, (fin, fout), jnp.float32, -scale, scale)
        wr = jax.random.uniform(k2, (fin, fout), jnp.float32, -scale, scale)
        b = jax.random.uniform(k3, (1, fout), jnp.float32, -scale, scale)
        params["convs"].append((wl, wr, b))
        if layer < num_layers - 1:
            key, k4, k5 = jax.random.split(key, 3)
            gamma = jnp.ones((1, fout), jnp.float32)
            beta = jnp.zeros((1, fout), jnp.float32)
            mean = 0.1 * jax.random.normal(k4, (1, fout), jnp.float32)
            var = 1.0 + 0.1 * jax.random.uniform(k5, (1, fout), jnp.float32)
            params["bns"].append((gamma, beta, mean, var))
    return params


# ---------------------------------------------------------------------------
# Pure-JAX reference (original, unfolded f32 semantics) for a sanity check.
# ---------------------------------------------------------------------------
def sage_forward_ref(params_convs, params_bns, x, adj):
    def conv(adj, x, wl, wr, b):
        deg = jnp.sum(adj, axis=-1, keepdims=True)
        deg_inv = jnp.where(deg > 0.0, 1.0 / deg, 0.0)
        agg = (adj @ x) * deg_inv
        return agg @ wl + x @ wr + b

    num_layers = len(params_convs)
    for i in range(num_layers - 1):
        wl, wr, b = params_convs[i]
        gamma, beta, mean, var = params_bns[i]
        x = conv(adj, x, wl, wr, b)
        x = (x - mean) / jnp.sqrt(var + BN_EPS) * gamma + beta
        x = jnp.maximum(x, 0.0)
    wl, wr, b = params_convs[-1]
    x = conv(adj, x, wl, wr, b)
    return jax.nn.log_softmax(x, axis=-1)


# ---------------------------------------------------------------------------
if __name__ == "__main__":
    N = 64            # number of graph nodes
    IN_C = 16
    HID_C = 32
    OUT_C = 8
    NUM_LAYERS = 3
    DROPOUT = 0.5     # identity in eval mode

    key = jax.random.PRNGKey(0)
    key, kx, ka = jax.random.split(key, 3)

    x = jax.random.normal(kx, (N, IN_C), jnp.float32)
    # Random sparse-ish adjacency (dense representation), with self-loops.
    adj = (jax.random.uniform(ka, (N, N)) < 0.1).astype(jnp.float32)
    adj = jnp.maximum(adj, jnp.eye(N, dtype=jnp.float32))

    params = init_sage_params(key, IN_C, HID_C, OUT_C, NUM_LAYERS)
    convs = tuple(params["convs"])
    bns = tuple(params["bns"])

    fwd = jax.jit(sage_forward_pallas)
    out = jax.block_until_ready(fwd(convs, bns, x, adj))

    ref = sage_forward_ref(convs, bns, x, adj)
    assert out.shape == (N, OUT_C)
    # All matmuls now bf16-in / f32-accumulate => relaxed tolerance vs the
    # pure-f32 reference.
    assert jnp.allclose(out, ref, atol=7.5e-2, rtol=7.5e-2), "mismatch vs JAX reference"

    print("KERNEL_OK")
</pallas_src>

<mosaic_0001>
module attributes {stable_mosaic.version = 11 : i64} {
  func.func @kernel(%arg0: memref<64x64xbf16, #tpu.memory_space<vmem>>, %arg1: memref<64x128xf32, #tpu.memory_space<vmem>>, %arg2: memref<64x128xbf16, #tpu.memory_space<vmem>>, %arg3: memref<3x128x256xbf16, #tpu.memory_space<vmem>>, %arg4: memref<3x128xf32, #tpu.memory_space<vmem>>, %arg5: memref<64x128xf32, #tpu.memory_space<vmem>>) attributes {dimension_semantics = [], scalar_prefetch = 0 : i64, scratch_operands = 0 : i64, tpu.core_type = #tpu.core_type<tc>} {
    %c0 = arith.constant 0 : index
    %c0_0 = arith.constant 0 : index
    %0 = vector.load %arg0[%c0, %c0_0] : memref<64x64xbf16, #tpu.memory_space<vmem>>, vector<64x64xbf16>
    %c0_1 = arith.constant 0 : index
    %c0_2 = arith.constant 0 : index
    %1 = vector.load %arg1[%c0_1, %c0_2] : memref<64x128xf32, #tpu.memory_space<vmem>>, vector<64x128xf32>
    %c0_3 = arith.constant 0 : index
    %c0_4 = arith.constant 0 : index
    %2 = vector.load %arg2[%c0_3, %c0_4] : memref<64x128xbf16, #tpu.memory_space<vmem>>, vector<64x128xbf16>
    %c0_5 = arith.constant 0 : index
    %c0_6 = arith.constant 0 : index
    %c0_7 = arith.constant 0 : index
    %3 = vector.load %arg3[%c0_5, %c0_6, %c0_7] : memref<3x128x256xbf16, #tpu.memory_space<vmem>>, vector<1x128x256xbf16>
    %4 = vector.shape_cast %3 : vector<1x128x256xbf16> to vector<128x256xbf16>
    %c0_8 = arith.constant 0 : index
    %c0_9 = arith.constant 0 : index
    %5 = vector.load %arg4[%c0_8, %c0_9] : memref<3x128xf32, #tpu.memory_space<vmem>>, vector<1x128xf32>
    %cst = arith.constant dense<0.000000e+00> : vector<64x256xf32>
    %6 = tpu.matmul %2, %4, %cst {dimension_numbers = #tpu.dot_dimension_numbers<[1], [0], [0], [1], [0, 0, 1, 1], [], []>} : vector<64x128xbf16>, vector<128x256xbf16>, vector<64x256xf32> -> vector<64x256xf32>
    %7 = vector.extract_strided_slice %6 {offsets = [0, 0], sizes = [64, 128], strides = [1, 1]} : vector<64x256xf32> to vector<64x128xf32>
    %8 = vector.extract_strided_slice %6 {offsets = [0, 128], sizes = [64, 128], strides = [1, 1]} : vector<64x256xf32> to vector<64x128xf32>
    %9 = arith.truncf %7 : vector<64x128xf32> to vector<64x128xbf16>
    %cst_10 = arith.constant dense<0.000000e+00> : vector<64x128xf32>
    %10 = tpu.matmul %0, %9, %cst_10 {dimension_numbers = #tpu.dot_dimension_numbers<[1], [0], [0], [1], [0, 0, 1, 1], [], []>} : vector<64x64xbf16>, vector<64x128xbf16>, vector<64x128xf32> -> vector<64x128xf32>
    %11 = arith.mulf %10, %1 : vector<64x128xf32>
    %12 = arith.addf %11, %8 : vector<64x128xf32>
    %13 = vector.broadcast %5 : vector<1x128xf32> to vector<64x128xf32>
    %14 = arith.addf %12, %13 : vector<64x128xf32>
    %cst_11 = arith.constant 0.000000e+00 : f32
    %15 = vector.broadcast %cst_11 : f32 to vector<64x128xf32>
    %16 = arith.maximumf %14, %15 : vector<64x128xf32>
    %17 = arith.truncf %16 : vector<64x128xf32> to vector<64x128xbf16>
    %c1 = arith.constant 1 : index
    %c0_12 = arith.constant 0 : index
    %c0_13 = arith.constant 0 : index
    %18 = vector.load %arg3[%c1, %c0_12, %c0_13] : memref<3x128x256xbf16, #tpu.memory_space<vmem>>, vector<1x128x256xbf16>
    %19 = vector.shape_cast %18 : vector<1x128x256xbf16> to vector<128x256xbf16>
    %c1_14 = arith.constant 1 : index
    %c0_15 = arith.constant 0 : index
    %20 = vector.load %arg4[%c1_14, %c0_15] : memref<3x128xf32, #tpu.memory_space<vmem>>, vector<1x128xf32>
    %cst_16 = arith.constant dense<0.000000e+00> : vector<64x256xf32>
    %21 = tpu.matmul %17, %19, %cst_16 {dimension_numbers = #tpu.dot_dimension_numbers<[1], [0], [0], [1], [0, 0, 1, 1], [], []>} : vector<64x128xbf16>, vector<128x256xbf16>, vector<64x256xf32> -> vector<64x256xf32>
    %22 = vector.extract_strided_slice %21 {offsets = [0, 0], sizes = [64, 128], strides = [1, 1]} : vector<64x256xf32> to vector<64x128xf32>
    %23 = vector.extract_strided_slice %21 {offsets = [0, 128], sizes = [64, 128], strides = [1, 1]} : vector<64x256xf32> to vector<64x128xf32>
    %24 = arith.truncf %22 : vector<64x128xf32> to vector<64x128xbf16>
    %cst_17 = arith.constant dense<0.000000e+00> : vector<64x128xf32>
    %25 = tpu.matmul %0, %24, %cst_17 {dimension_numbers = #tpu.dot_dimension_numbers<[1], [0], [0], [1], [0, 0, 1, 1], [], []>} : vector<64x64xbf16>, vector<64x128xbf16>, vector<64x128xf32> -> vector<64x128xf32>
    %26 = arith.mulf %25, %1 : vector<64x128xf32>
    %27 = arith.addf %26, %23 : vector<64x128xf32>
    %28 = vector.broadcast %20 : vector<1x128xf32> to vector<64x128xf32>
    %29 = arith.addf %27, %28 : vector<64x128xf32>
    %cst_18 = arith.constant 0.000000e+00 : f32
    %30 = vector.broadcast %cst_18 : f32 to vector<64x128xf32>
    %31 = arith.maximumf %29, %30 : vector<64x128xf32>
    %32 = arith.truncf %31 : vector<64x128xf32> to vector<64x128xbf16>
    %c2 = arith.constant 2 : index
    %c0_19 = arith.constant 0 : index
    %c0_20 = arith.constant 0 : index
    %33 = vector.load %arg3[%c2, %c0_19, %c0_20] : memref<3x128x256xbf16, #tpu.memory_space<vmem>>, vector<1x128x256xbf16>
    %34 = vector.shape_cast %33 : vector<1x128x256xbf16> to vector<128x256xbf16>
    %c2_21 = arith.constant 2 : index
    %c0_22 = arith.constant 0 : index
    %35 = vector.load %arg4[%c2_21, %c0_22] : memref<3x128xf32, #tpu.memory_space<vmem>>, vector<1x128xf32>
    %cst_23 = arith.constant dense<0.000000e+00> : vector<64x256xf32>
    %36 = tpu.matmul %32, %34, %cst_23 {dimension_numbers = #tpu.dot_dimension_numbers<[1], [0], [0], [1], [0, 0, 1, 1], [], []>} : vector<64x128xbf16>, vector<128x256xbf16>, vector<64x256xf32> -> vector<64x256xf32>
    %37 = vector.extract_strided_slice %36 {offsets = [0, 0], sizes = [64, 128], strides = [1, 1]} : vector<64x256xf32> to vector<64x128xf32>
    %38 = vector.extract_strided_slice %36 {offsets = [0, 128], sizes = [64, 128], strides = [1, 1]} : vector<64x256xf32> to vector<64x128xf32>
    %39 = arith.truncf %37 : vector<64x128xf32> to vector<64x128xbf16>
    %cst_24 = arith.constant dense<0.000000e+00> : vector<64x128xf32>
    %40 = tpu.matmul %0, %39, %cst_24 {dimension_numbers = #tpu.dot_dimension_numbers<[1], [0], [0], [1], [0, 0, 1, 1], [], []>} : vector<64x64xbf16>, vector<64x128xbf16>, vector<64x128xf32> -> vector<64x128xf32>
    %41 = arith.mulf %40, %1 : vector<64x128xf32>
    %42 = arith.addf %41, %38 : vector<64x128xf32>
    %43 = vector.broadcast %35 : vector<1x128xf32> to vector<64x128xf32>
    %44 = arith.addf %42, %43 : vector<64x128xf32>
    %45 = tpu.iota {dimensions = array<i32: 1>} : vector<64x128xi32>
    %c8_i32 = arith.constant 8 : i32
    %46 = vector.broadcast %c8_i32 : i32 to vector<64x128xi32>
    %47 = arith.cmpi slt, %45, %46 : vector<64x128xi32>
    %cst_25 = arith.constant -1.000000e+30 : f32
    %48 = vector.broadcast %cst_25 : f32 to vector<64x128xf32>
    %49 = arith.select %47, %44, %48 : vector<64x128xi1>, vector<64x128xf32>
    %cst_26 = arith.constant dense<0xFF800000> : vector<64xf32>
    %50 = vector.multi_reduction <maximumf>, %49, %cst_26 [1] : vector<64x128xf32> to vector<64xf32>
    %51 = vector.shape_cast %50 : vector<64xf32> to vector<64x1xf32>
    %52 = vector.broadcast %51 : vector<64x1xf32> to vector<64x128xf32>
    %53 = arith.subf %49, %52 : vector<64x128xf32>
    %54 = math.exp %53 : vector<64x128xf32>
    %cst_27 = arith.constant dense<0.000000e+00> : vector<64xf32>
    %55 = vector.multi_reduction <add>, %54, %cst_27 [1] : vector<64x128xf32> to vector<64xf32>
    %56 = vector.shape_cast %55 : vector<64xf32> to vector<64x1xf32>
    %57 = math.log %56 : vector<64x1xf32>
    %58 = arith.addf %57, %51 : vector<64x1xf32>
    %59 = vector.broadcast %58 : vector<64x1xf32> to vector<64x128xf32>
    %60 = arith.subf %49, %59 : vector<64x128xf32>
    %c0_28 = arith.constant 0 : index
    %c0_29 = arith.constant 0 : index
    %61 = vector.load %arg5[%c0_28, %c0_29] : memref<64x128xf32, #tpu.memory_space<vmem>>, vector<64x128xf32>
    tpu.vector_store %arg5[%c0_28, %c0_29], %60 {strides = array<i32>} : memref<64x128xf32, #tpu.memory_space<vmem>>, vector<64x128xf32>,
    return
  }
}

</mosaic_0001>

<llo_original>
// kernel: sage_forward_pallas.1
$region0: #{sage_forward_pallas.1}
  #allocation0 [shape = 'u32[]', space=smem, size = 0x4, offset = 0x4, fixed_abs, tag = 'smem constant byte address 0x4 - core index']
  #allocation1 [shape = 'u32[144,128]{1,0:T(1,128)}', space=vmem, size = 0x12000, scoped, tag = 'internal scratch']
  %s0 = inlined_call_operand.vmem [shape: bf16[64,64], index: 0, kind: input, shape index: {}]
  %s1 = inlined_call_operand.vmem [shape: f32[64,128], index: 1, kind: input, shape index: {}]
  %s2 = inlined_call_operand.vmem [shape: bf16[64,128], index: 2, kind: input, shape index: {}]
  %s3 = inlined_call_operand.vmem [shape: bf16[3,128,256], index: 3, kind: input, shape index: {}]
  %s4 = inlined_call_operand.vmem [shape: f32[3,128], index: 4, kind: input, shape index: {}]
  %s5 = inlined_call_operand.vmem [shape: f32[64,128], index: 5, kind: output, shape index: {}]
  %s6 = sld [smem:[#allocation0]]
  $region30: #{sage_forward_pallas.1} parent=0
    _
  %s8 = ssub.s32 1, %s6
  %s9 = scalar_select 0, %s8, %s6
  // Predicated region
  $region2: #{sage_forward_pallas.1} parent=0 // pred_check
    _
  $region3: #{sage_forward_pallas.1} parent=0 // pred_check_branch
    %11 = sbr.rel (0) target = $region5
  $region4: #{sage_forward_pallas.1} parent=0 // pred_region
    _
  $region5: #{sage_forward_pallas.1} parent=0 // pred_fallthru
    _
  // Predicated region
  $region6: #{sage_forward_pallas.1} parent=0 // pred_check
    _
  $region7: #{sage_forward_pallas.1} parent=0 // pred_check_branch
    %13 = sbr.rel (0) target = $region9
  $region8: #{sage_forward_pallas.1} parent=0 // pred_region
    _
  $region9: #{sage_forward_pallas.1} parent=0 // pred_fallthru
    _
  // Predicated region
  $region10: #{sage_forward_pallas.1} parent=0 // pred_check
    _
  $region11: #{sage_forward_pallas.1} parent=0 // pred_check_branch
    %15 = sbr.rel (0) target = $region13
  $region12: #{sage_forward_pallas.1} parent=0 // pred_region
    _
  $region13: #{sage_forward_pallas.1} parent=0 // pred_fallthru
    _
  // Predicated region
  $region14: #{sage_forward_pallas.1} parent=0 // pred_check
    _
  $region15: #{sage_forward_pallas.1} parent=0 // pred_check_branch
    %17 = sbr.rel (0) target = $region17
  $region16: #{sage_forward_pallas.1} parent=0 // pred_region
    _
  $region17: #{sage_forward_pallas.1} parent=0 // pred_fallthru
    _
  // Predicated region
  $region18: #{sage_forward_pallas.1} parent=0 // pred_check
    _
  $region19: #{sage_forward_pallas.1} parent=0 // pred_check_branch
    %19 = sbr.rel (0) target = $region21
  $region20: #{sage_forward_pallas.1} parent=0 // pred_region
    _
  $region21: #{sage_forward_pallas.1} parent=0 // pred_fallthru
    _
  %v21 = vld [vmem:[%s0] sm:$0xf]
  %v22 = vld [vmem:[%s0 + $0x4] sm:$0xf]
  %v23 = vld [vmem:[%s0 + $0x8] sm:$0xf]
  %v24 = vld [vmem:[%s0 + $0xc] sm:$0xf]
  %v25 = vld [vmem:[%s0 + $0x10] sm:$0xf]
  %v26 = vld [vmem:[%s0 + $0x14] sm:$0xf]
  %v27 = vld [vmem:[%s0 + $0x18] sm:$0xf]
  %v28 = vld [vmem:[%s0 + $0x1c] sm:$0xf]
  %v29 = vld [vmem:[%s1] sm:$0xff]
  %v30 = vld [vmem:[%s1 + $0x8] sm:$0xff]
  %v31 = vld [vmem:[%s1 + $0x10] sm:$0xff]
  %v32 = vld [vmem:[%s1 + $0x18] sm:$0xff]
  %v33 = vld [vmem:[%s1 + $0x20] sm:$0xff]
  %v34 = vld [vmem:[%s1 + $0x28] sm:$0xff]
  %v35 = vld [vmem:[%s1 + $0x30] sm:$0xff]
  %v36 = vld [vmem:[%s1 + $0x38] sm:$0xff]
  %v37 = vld [vmem:[%s2] sm:$0xf]
  %v38 = vld [vmem:[%s2 + $0x4] sm:$0xf]
  %v39 = vld [vmem:[%s2 + $0x8] sm:$0xf]
  %v40 = vld [vmem:[%s2 + $0xc] sm:$0xf]
  %v41 = vld [vmem:[%s2 + $0x10] sm:$0xf]
  %v42 = vld [vmem:[%s2 + $0x14] sm:$0xf]
  %v43 = vld [vmem:[%s2 + $0x18] sm:$0xf]
  %v44 = vld [vmem:[%s2 + $0x1c] sm:$0xf]
  %v45 = vld [vmem:[%s3] sm:$0xff]
  %v46 = vld [vmem:[%s3 + $0x8] sm:$0xff]
  %v47 = vld [vmem:[%s3 + $0x10] sm:$0xff]
  %v48 = vld [vmem:[%s3 + $0x18] sm:$0xff]
  %v49 = vld [vmem:[%s3 + $0x20] sm:$0xff]
  %v50 = vld [vmem:[%s3 + $0x28] sm:$0xff]
  %v51 = vld [vmem:[%s3 + $0x30] sm:$0xff]
  %v52 = vld [vmem:[%s3 + $0x38] sm:$0xff]
  %v53 = vld [vmem:[%s3 + $0x40] sm:$0xff]
  %v54 = vld [vmem:[%s3 + $0x48] sm:$0xff]
  %v55 = vld [vmem:[%s3 + $0x50] sm:$0xff]
  %v56 = vld [vmem:[%s3 + $0x58] sm:$0xff]
  %v57 = vld [vmem:[%s3 + $0x60] sm:$0xff]
  %v58 = vld [vmem:[%s3 + $0x68] sm:$0xff]
  %v59 = vld [vmem:[%s3 + $0x70] sm:$0xff]
  %v60 = vld [vmem:[%s3 + $0x78] sm:$0xff]
  %v61 = vld [vmem:[%s4] sm:$0x1]
  %v70 = vunpack.c.l.b16 %v37
  %v71 = vunpack.c.l.b16 %v38
  %v72 = vunpack.c.l.b16 %v39
  %v73 = vunpack.c.l.b16 %v40
  %v74 = vunpack.c.l.b16 %v41
  %v75 = vunpack.c.l.b16 %v42
  %v76 = vunpack.c.l.b16 %v43
  %v77 = vunpack.c.l.b16 %v44
  %v78 = vpack.c.b16 %v71, %v70
  %v79 = vpack.c.b16 %v73, %v72
  %v80 = vpack.c.b16 %v75, %v74
  %v81 = vpack.c.b16 %v77, %v76
  %v102 = vunpack.c.l.b16 %v45
  %v103 = vunpack.c.h.b16 %v45
  %v104 = vunpack.c.l.b16 %v46
  %v105 = vunpack.c.h.b16 %v46
  %v106 = vunpack.c.l.b16 %v47
  %v107 = vunpack.c.h.b16 %v47
  %v108 = vunpack.c.l.b16 %v48
  %v109 = vunpack.c.h.b16 %v48
  %v110 = vunpack.c.l.b16 %v49
  %v111 = vunpack.c.h.b16 %v49
  %v112 = vunpack.c.l.b16 %v50
  %v113 = vunpack.c.h.b16 %v50
  %v114 = vunpack.c.l.b16 %v51
  %v115 = vunpack.c.h.b16 %v51
  %v116 = vunpack.c.l.b16 %v52
  %v117 = vunpack.c.h.b16 %v52
  %v118 = vunpack.c.l.b16 %v53
  %v119 = vunpack.c.h.b16 %v53
  %v120 = vunpack.c.l.b16 %v54
  %v121 = vunpack.c.h.b16 %v54
  %v122 = vunpack.c.l.b16 %v55
  %v123 = vunpack.c.h.b16 %v55
  %v124 = vunpack.c.l.b16 %v56
  %v125 = vunpack.c.h.b16 %v56
  %v126 = vunpack.c.l.b16 %v57
  %v127 = vunpack.c.h.b16 %v57
  %v128 = vunpack.c.l.b16 %v58
  %v129 = vunpack.c.h.b16 %v58
  %v130 = vunpack.c.l.b16 %v59
  %v131 = vunpack.c.h.b16 %v59
  %v132 = vunpack.c.l.b16 %v60
  %v133 = vunpack.c.h.b16 %v60
  %v134 = vpack.c.b16 %v104, %v102
  %v135 = vpack.c.b16 %v105, %v103
  %v136 = vpack.c.b16 %v108, %v106
  %v137 = vpack.c.b16 %v109, %v107
  %v138 = vpack.c.b16 %v112, %v110
  %v139 = vpack.c.b16 %v113, %v111
  %v140 = vpack.c.b16 %v116, %v114
  %v141 = vpack.c.b16 %v117, %v115
  %v142 = vpack.c.b16 %v120, %v118
  %v143 = vpack.c.b16 %v121, %v119
  %v144 = vpack.c.b16 %v124, %v122
  %v145 = vpack.c.b16 %v125, %v123
  %v146 = vpack.c.b16 %v128, %v126
  %v147 = vpack.c.b16 %v129, %v127
  %v148 = vpack.c.b16 %v132, %v130
  %v149 = vpack.c.b16 %v133, %v131
  %166 = vmatprep.subr.bf16.mxu0 %v135
  %167 = vmatpush1.bf16.msra.mxu0 %v134
  %168 = vmatprep.subr.bf16.mxu0 %v137
  %169 = vmatpush1.bf16.msra.mxu0 %v136
  %170 = vmatprep.subr.bf16.mxu0 %v139
  %171 = vmatpush1.bf16.msra.mxu0 %v138
  %172 = vmatprep.subr.bf16.mxu0 %v141
  %173 = vmatpush1.bf16.msra.mxu0 %v140
  %174 = vmatprep.subr.bf16.mxu0 %v143
  %175 = vmatpush1.bf16.msra.mxu0 %v142
  %176 = vmatprep.subr.bf16.mxu0 %v145
  %177 = vmatpush1.bf16.msra.mxu0 %v144
  %178 = vmatprep.subr.bf16.mxu0 %v147
  %179 = vmatpush1.bf16.msra.mxu0 %v146
  %180 = vmatprep.subr.bf16.mxu0 %v149
  %181 = vmatpush1.bf16.msra.mxu0 %v148
  %182 = vmatprep.subr.bf16.mxu0 0
  %183 = vmatpush1.bf16.msra.mxu0 0
  %184 = vmatprep.subr.bf16.mxu0 0
  %185 = vmatpush1.bf16.msra.mxu0 0
  %186 = vmatprep.subr.bf16.mxu0 0
  %187 = vmatpush1.bf16.msra.mxu0 0
  %188 = vmatprep.subr.bf16.mxu0 0
  %189 = vmatpush1.bf16.msra.mxu0 0
  %190 = vmatprep.subr.bf16.mxu0 0
  %191 = vmatpush1.bf16.msra.mxu0 0
  %192 = vmatprep.subr.bf16.mxu0 0
  %193 = vmatpush1.bf16.msra.mxu0 0
  %194 = vmatprep.subr.bf16.mxu0 0
  %195 = vmatpush1.bf16.msra.mxu0 0
  %196 = vmatprep.subr.bf16.mxu0 0
  %197 = vmatpush1.bf16.msra.mxu0 0
  %198 = vmatprep.mubr.bf16.mxu0 0
  %199 = vmatmul.mubr.bf16.gmra.mrb[0].mxu0 %v78
  %v200 = vpop.f32.mrb[0].mxu0
  %v201 = vadd.f32 0.0, %v200
  %v202 = vpop.f32.mrb[0].mxu0
  %v203 = vadd.f32 0.0, %v202
  %v204 = vpop.f32.mrb[0].mxu0
  %v205 = vadd.f32 0.0, %v204
  %v206 = vpop.f32.mrb[0].mxu0
  %v207 = vadd.f32 0.0, %v206
  %208 = vmatprep.mubr.bf16.mxu0 0
  %209 = vmatmul.mubr.bf16.gmra.mrb[0].mxu0 %v79
  %v210 = vpop.f32.mrb[0].mxu0
  %v211 = vadd.f32 0.0, %v210
  %v212 = vpop.f32.mrb[0].mxu0
  %v213 = vadd.f32 0.0, %v212
  %v214 = vpop.f32.mrb[0].mxu0
  %v215 = vadd.f32 0.0, %v214
  %v216 = vpop.f32.mrb[0].mxu0
  %v217 = vadd.f32 0.0, %v216
  %218 = vmatprep.mubr.bf16.mxu0 0
  %219 = vmatmul.mubr.bf16.gmra.mrb[0].mxu0 %v80
  %v220 = vpop.f32.mrb[0].mxu0
  %v221 = vadd.f32 0.0, %v220
  %v222 = vpop.f32.mrb[0].mxu0
  %v223 = vadd.f32 0.0, %v222
  %v224 = vpop.f32.mrb[0].mxu0
  %v225 = vadd.f32 0.0, %v224
  %v226 = vpop.f32.mrb[0].mxu0
  %v227 = vadd.f32 0.0, %v226
  %228 = vmatprep.mubr.bf16.mxu0 0
  %229 = vmatmul.mubr.bf16.gmra.mrb[0].mxu0 %v81
  %v230 = vpop.f32.mrb[0].mxu0
  %v231 = vadd.f32 0.0, %v230
  %v232 = vpop.f32.mrb[0].mxu0
  %v233 = vadd.f32 0.0, %v232
  %v234 = vpop.f32.mrb[0].mxu0
  %v235 = vadd.f32 0.0, %v234
  %v236 = vpop.f32.mrb[0].mxu0
  %v237 = vadd.f32 0.0, %v236
  %238 = vdwg.mxu0
  %v239 = vpack.c.bf16 %v205, %v201
  %v240 = vpack.c.bf16 %v215, %v211
  %v241 = vpack.c.bf16 %v225, %v221
  %v242 = vpack.c.bf16 %v235, %v231
  %v251 = vunpack.c.l.b16 %v21
  %v252 = vunpack.c.l.b16 %v22
  %v253 = vunpack.c.l.b16 %v23
  %v254 = vunpack.c.l.b16 %v24
  %v255 = vunpack.c.l.b16 %v25
  %v256 = vunpack.c.l.b16 %v26
  %v257 = vunpack.c.l.b16 %v27
  %v258 = vunpack.c.l.b16 %v28
  %v259 = vpack.c.b16 %v252, %v251
  %v260 = vpack.c.b16 %v254, %v253
  %v261 = vpack.c.b16 %v256, %v255
  %v262 = vpack.c.b16 %v258, %v257
  %vm263 = vcmask 523264
  %v265 = vsel %vm263, %v259, 0
  %v268 = vsel %vm263, %v260, 0
  %v271 = vsel %vm263, %v261, 0
  %v274 = vsel %vm263, %v262, 0
  %276 = vmatprep.subr.bf16.mxu0 0
  %277 = vmatpush1.bf16.msra.mxu0 %v239
  %278 = vmatprep.subr.bf16.mxu0 0
  %279 = vmatpush1.bf16.msra.mxu0 %v240
  %280 = vmatprep.subr.bf16.mxu0 0
  %281 = vmatpush1.bf16.msra.mxu0 %v241
  %282 = vmatprep.subr.bf16.mxu0 0
  %283 = vmatpush1.bf16.msra.mxu0 %v242
  %284 = vmatprep.subr.bf16.mxu0 0
  %285 = vmatpush1.bf16.msra.mxu0 0
  %286 = vmatprep.subr.bf16.mxu0 0
  %287 = vmatpush1.bf16.msra.mxu0 0
  %288 = vmatprep.subr.bf16.mxu0 0
  %289 = vmatpush1.bf16.msra.mxu0 0
  %290 = vmatprep.subr.bf16.mxu0 0
  %291 = vmatpush1.bf16.msra.mxu0 0
  %292 = vmatprep.subr.bf16.mxu0 0
  %293 = vmatpush1.bf16.msra.mxu0 0
  %294 = vmatprep.subr.bf16.mxu0 0
  %295 = vmatpush1.bf16.msra.mxu0 0
  %296 = vmatprep.subr.bf16.mxu0 0
  %297 = vmatpush1.bf16.msra.mxu0 0
  %298 = vmatprep.subr.bf16.mxu0 0
  %299 = vmatpush1.bf16.msra.mxu0 0
  %300 = vmatprep.subr.bf16.mxu0 0
  %301 = vmatpush1.bf16.msra.mxu0 0
  %302 = vmatprep.subr.bf16.mxu0 0
  %303 = vmatpush1.bf16.msra.mxu0 0
  %304 = vmatprep.subr.bf16.mxu0 0
  %305 = vmatpush1.bf16.msra.mxu0 0
  %306 = vmatprep.subr.bf16.mxu0 0
  %307 = vmatpush1.bf16.msra.mxu0 0
  %308 = vmatprep.mubr.bf16.mxu0 0
  %309 = vmatmul.mubr.bf16.gmra.mrb[0].mxu0 %v265
  %v310 = vpop.f32.mrb[0].mxu0
  %v311 = vadd.f32 0.0, %v310
  %v312 = vpop.f32.mrb[0].mxu0
  %v313 = vpop.f32.mrb[0].mxu0
  %v314 = vadd.f32 0.0, %v313
  %v315 = vpop.f32.mrb[0].mxu0
  %316 = vmatprep.mubr.bf16.mxu0 0
  %317 = vmatmul.mubr.bf16.gmra.mrb[0].mxu0 %v268
  %v318 = vpop.f32.mrb[0].mxu0
  %v319 = vadd.f32 0.0, %v318
  %v320 = vpop.f32.mrb[0].mxu0
  %v321 = vpop.f32.mrb[0].mxu0
  %v322 = vadd.f32 0.0, %v321
  %v323 = vpop.f32.mrb[0].mxu0
  %324 = vmatprep.mubr.bf16.mxu0 0
  %325 = vmatmul.mubr.bf16.gmra.mrb[0].mxu0 %v271
  %v326 = vpop.f32.mrb[0].mxu0
  %v327 = vadd.f32 0.0, %v326
  %v328 = vpop.f32.mrb[0].mxu0
  %v329 = vpop.f32.mrb[0].mxu0
  %v330 = vadd.f32 0.0, %v329
  %v331 = vpop.f32.mrb[0].mxu0
  %332 = vmatprep.mubr.bf16.mxu0 0
  %333 = vmatmul.mubr.bf16.gmra.mrb[0].mxu0 %v274
  %v334 = vpop.f32.mrb[0].mxu0
  %v335 = vadd.f32 0.0, %v334
  %v336 = vpop.f32.mrb[0].mxu0
  %v337 = vpop.f32.mrb[0].mxu0
  %v338 = vadd.f32 0.0, %v337
  %v339 = vpop.f32.mrb[0].mxu0
  %340 = vdwg.mxu0
  %v341 = vmul.f32 %v311, %v29
  %v342 = vmul.f32 %v314, %v30
  %v343 = vmul.f32 %v319, %v31
  %v344 = vmul.f32 %v322, %v32
  %v345 = vmul.f32 %v327, %v33
  %v346 = vmul.f32 %v330, %v34
  %v347 = vmul.f32 %v335, %v35
  %v348 = vmul.f32 %v338, %v36
  %v349 = vadd.f32 %v341, %v203
  %v350 = vadd.f32 %v342, %v207
  %v351 = vadd.f32 %v343, %v213
  %v352 = vadd.f32 %v344, %v217
  %v353 = vadd.f32 %v345, %v223
  %v354 = vadd.f32 %v346, %v227
  %v355 = vadd.f32 %v347, %v233
  %v356 = vadd.f32 %v348, %v237
  %v357 = vlaneseq
  %v358 = vshrl.u32 %v357, 7
  %v359 = vsub.s32 0, %v358
  %v360 = vrot.slane %v61, %v359
  %v361 = vadd.f32 %v349, %v360
  %v362 = vadd.f32 %v350, %v360
  %v363 = vadd.f32 %v351, %v360
  %v364 = vadd.f32 %v352, %v360
  %v365 = vadd.f32 %v353, %v360
  %v366 = vadd.f32 %v354, %v360
  %v367 = vadd.f32 %v355, %v360
  %v368 = vadd.f32 %v356, %v360
  %v369 = vmax.f32 %v361, 0.0
  %v370 = vmax.f32 %v362, 0.0
  %v371 = vmax.f32 %v363, 0.0
  %v372 = vmax.f32 %v364, 0.0
  %v373 = vmax.f32 %v365, 0.0
  %v374 = vmax.f32 %v366, 0.0
  %v375 = vmax.f32 %v367, 0.0
  %v376 = vmax.f32 %v368, 0.0
  %v377 = vpack.c.bf16 %v370, %v369
  %v378 = vpack.c.bf16 %v372, %v371
  %v379 = vpack.c.bf16 %v374, %v373
  %v380 = vpack.c.bf16 %v376, %v375
  %s381 = scalar_lea.vmem %s3, 128
  %v382 = vld [vmem:[%s381] sm:$0xff]
  %v383 = vld [vmem:[%s381 + $0x8] sm:$0xff]
  %v384 = vld [vmem:[%s381 + $0x10] sm:$0xff]
  %v385 = vld [vmem:[%s381 + $0x18] sm:$0xff]
  %v386 = vld [vmem:[%s381 + $0x20] sm:$0xff]
  %v387 = vld [vmem:[%s381 + $0x28] sm:$0xff]
  %v388 = vld [vmem:[%s381 + $0x30] sm:$0xff]
  %v389 = vld [vmem:[%s381 + $0x38] sm:$0xff]
  %v390 = vld [vmem:[%s381 + $0x40] sm:$0xff]
  %v391 = vld [vmem:[%s381 + $0x48] sm:$0xff]
  %v392 = vld [vmem:[%s381 + $0x50] sm:$0xff]
  %v393 = vld [vmem:[%s381 + $0x58] sm:$0xff]
  %v394 = vld [vmem:[%s381 + $0x60] sm:$0xff]
  %v395 = vld [vmem:[%s381 + $0x68] sm:$0xff]
  %v396 = vld [vmem:[%s381 + $0x70] sm:$0xff]
  %v397 = vld [vmem:[%s381 + $0x78] sm:$0xff]
  %v398 = vld [vmem:[%s4 + $0x1] sm:$0x1]
  %v415 = vunpack.c.l.b16 %v382
  %v416 = vunpack.c.h.b16 %v382
  %v417 = vunpack.c.l.b16 %v383
  %v418 = vunpack.c.h.b16 %v383
  %v419 = vunpack.c.l.b16 %v384
  %v420 = vunpack.c.h.b16 %v384
  %v421 = vunpack.c.l.b16 %v385
  %v422 = vunpack.c.h.b16 %v385
  %v423 = vunpack.c.l.b16 %v386
  %v424 = vunpack.c.h.b16 %v386
  %v425 = vunpack.c.l.b16 %v387
  %v426 = vunpack.c.h.b16 %v387
  %v427 = vunpack.c.l.b16 %v388
  %v428 = vunpack.c.h.b16 %v388
  %v429 = vunpack.c.l.b16 %v389
  %v430 = vunpack.c.h.b16 %v389
  %v431 = vunpack.c.l.b16 %v390
  %v432 = vunpack.c.h.b16 %v390
  %v433 = vunpack.c.l.b16 %v391
  %v434 = vunpack.c.h.b16 %v391
  %v435 = vunpack.c.l.b16 %v392
  %v436 = vunpack.c.h.b16 %v392
  %v437 = vunpack.c.l.b16 %v393
  %v438 = vunpack.c.h.b16 %v393
  %v439 = vunpack.c.l.b16 %v394
  %v440 = vunpack.c.h.b16 %v394
  %v441 = vunpack.c.l.b16 %v395
  %v442 = vunpack.c.h.b16 %v395
  %v443 = vunpack.c.l.b16 %v396
  %v444 = vunpack.c.h.b16 %v396
  %v445 = vunpack.c.l.b16 %v397
  %v446 = vunpack.c.h.b16 %v397
  %v447 = vpack.c.b16 %v417, %v415
  %v448 = vpack.c.b16 %v418, %v416
  %v449 = vpack.c.b16 %v421, %v419
  %v450 = vpack.c.b16 %v422, %v420
  %v451 = vpack.c.b16 %v425, %v423
  %v452 = vpack.c.b16 %v426, %v424
  %v453 = vpack.c.b16 %v429, %v427
  %v454 = vpack.c.b16 %v430, %v428
  %v455 = vpack.c.b16 %v433, %v431
  %v456 = vpack.c.b16 %v434, %v432
  %v457 = vpack.c.b16 %v437, %v435
  %v458 = vpack.c.b16 %v438, %v436
  %v459 = vpack.c.b16 %v441, %v439
  %v460 = vpack.c.b16 %v442, %v440
  %v461 = vpack.c.b16 %v445, %v443
  %v462 = vpack.c.b16 %v446, %v444
  %479 = vmatprep.subr.bf16.mxu0 %v448
  %480 = vmatpush1.bf16.msra.mxu0 %v447
  %481 = vmatprep.subr.bf16.mxu0 %v450
  %482 = vmatpush1.bf16.msra.mxu0 %v449
  %483 = vmatprep.subr.bf16.mxu0 %v452
  %484 = vmatpush1.bf16.msra.mxu0 %v451
  %485 = vmatprep.subr.bf16.mxu0 %v454
  %486 = vmatpush1.bf16.msra.mxu0 %v453
  %487 = vmatprep.subr.bf16.mxu0 %v456
  %488 = vmatpush1.bf16.msra.mxu0 %v455
  %489 = vmatprep.subr.bf16.mxu0 %v458
  %490 = vmatpush1.bf16.msra.mxu0 %v457
  %491 = vmatprep.subr.bf16.mxu0 %v460
  %492 = vmatpush1.bf16.msra.mxu0 %v459
  %493 = vmatprep.subr.bf16.mxu0 %v462
  %494 = vmatpush1.bf16.msra.mxu0 %v461
  %495 = vmatprep.subr.bf16.mxu0 0
  %496 = vmatpush1.bf16.msra.mxu0 0
  %497 = vmatprep.subr.bf16.mxu0 0
  %498 = vmatpush1.bf16.msra.mxu0 0
  %499 = vmatprep.subr.bf16.mxu0 0
  %500 = vmatpush1.bf16.msra.mxu0 0
  %501 = vmatprep.subr.bf16.mxu0 0
  %502 = vmatpush1.bf16.msra.mxu0 0
  %503 = vmatprep.subr.bf16.mxu0 0
  %504 = vmatpush1.bf16.msra.mxu0 0
  %505 = vmatprep.subr.bf16.mxu0 0
  %506 = vmatpush1.bf16.msra.mxu0 0
  %507 = vmatprep.subr.bf16.mxu0 0
  %508 = vmatpush1.bf16.msra.mxu0 0
  %509 = vmatprep.subr.bf16.mxu0 0
  %510 = vmatpush1.bf16.msra.mxu0 0
  %511 = vmatprep.mubr.bf16.mxu0 0
  %512 = vmatmul.mubr.bf16.gmra.mrb[0].mxu0 %v377
  %v513 = vpop.f32.mrb[0].mxu0
  %v514 = vadd.f32 0.0, %v513
  %v515 = vpop.f32.mrb[0].mxu0
  %v516 = vadd.f32 0.0, %v515
  %v517 = vpop.f32.mrb[0].mxu0
  %v518 = vadd.f32 0.0, %v517
  %v519 = vpop.f32.mrb[0].mxu0
  %v520 = vadd.f32 0.0, %v519
  %521 = vmatprep.mubr.bf16.mxu0 0
  %522 = vmatmul.mubr.bf16.gmra.mrb[0].mxu0 %v378
  %v523 = vpop.f32.mrb[0].mxu0
  %v524 = vadd.f32 0.0, %v523
  %v525 = vpop.f32.mrb[0].mxu0
  %v526 = vadd.f32 0.0, %v525
  %v527 = vpop.f32.mrb[0].mxu0
  %v528 = vadd.f32 0.0, %v527
  %v529 = vpop.f32.mrb[0].mxu0
  %v530 = vadd.f32 0.0, %v529
  %531 = vmatprep.mubr.bf16.mxu0 0
  %532 = vmatmul.mubr.bf16.gmra.mrb[0].mxu0 %v379
  %v533 = vpop.f32.mrb[0].mxu0
  %v534 = vadd.f32 0.0, %v533
  %v535 = vpop.f32.mrb[0].mxu0
  %v536 = vadd.f32 0.0, %v535
  %v537 = vpop.f32.mrb[0].mxu0
  %v538 = vadd.f32 0.0, %v537
  %v539 = vpop.f32.mrb[0].mxu0
  %v540 = vadd.f32 0.0, %v539
  %541 = vmatprep.mubr.bf16.mxu0 0
  %542 = vmatmul.mubr.bf16.gmra.mrb[0].mxu0 %v380
  %v543 = vpop.f32.mrb[0].mxu0
  %v544 = vadd.f32 0.0, %v543
  %v545 = vpop.f32.mrb[0].mxu0
  %v546 = vadd.f32 0.0, %v545
  %v547 = vpop.f32.mrb[0].mxu0
  %v548 = vadd.f32 0.0, %v547
  %v549 = vpop.f32.mrb[0].mxu0
  %v550 = vadd.f32 0.0, %v549
  %551 = vdwg.mxu0
  %v552 = vpack.c.bf16 %v518, %v514
  %v553 = vpack.c.bf16 %v528, %v524
  %v554 = vpack.c.bf16 %v538, %v534
  %v555 = vpack.c.bf16 %v548, %v544
  %556 = vmatprep.subr.bf16.mxu0 0
  %557 = vmatpush1.bf16.msra.mxu0 %v552
  %558 = vmatprep.subr.bf16.mxu0 0
  %559 = vmatpush1.bf16.msra.mxu0 %v553
  %560 = vmatprep.subr.bf16.mxu0 0
  %561 = vmatpush1.bf16.msra.mxu0 %v554
  %562 = vmatprep.subr.bf16.mxu0 0
  %563 = vmatpush1.bf16.msra.mxu0 %v555
  %564 = vmatprep.subr.bf16.mxu0 0
  %565 = vmatpush1.bf16.msra.mxu0 0
  %566 = vmatprep.subr.bf16.mxu0 0
  %567 = vmatpush1.bf16.msra.mxu0 0
  %568 = vmatprep.subr.bf16.mxu0 0
  %569 = vmatpush1.bf16.msra.mxu0 0
  %570 = vmatprep.subr.bf16.mxu0 0
  %571 = vmatpush1.bf16.msra.mxu0 0
  %572 = vmatprep.subr.bf16.mxu0 0
  %573 = vmatpush1.bf16.msra.mxu0 0
  %574 = vmatprep.subr.bf16.mxu0 0
  %575 = vmatpush1.bf16.msra.mxu0 0
  %576 = vmatprep.subr.bf16.mxu0 0
  %577 = vmatpush1.bf16.msra.mxu0 0
  %578 = vmatprep.subr.bf16.mxu0 0
  %579 = vmatpush1.bf16.msra.mxu0 0
  %580 = vmatprep.subr.bf16.mxu0 0
  %581 = vmatpush1.bf16.msra.mxu0 0
  %582 = vmatprep.subr.bf16.mxu0 0
  %583 = vmatpush1.bf16.msra.mxu0 0
  %584 = vmatprep.subr.bf16.mxu0 0
  %585 = vmatpush1.bf16.msra.mxu0 0
  %586 = vmatprep.subr.bf16.mxu0 0
  %587 = vmatpush1.bf16.msra.mxu0 0
  %588 = vmatprep.mubr.bf16.mxu0 0
  %589 = vmatmul.mubr.bf16.gmra.mrb[0].mxu0 %v265
  %v590 = vpop.f32.mrb[0].mxu0
  %v591 = vadd.f32 0.0, %v590
  %v592 = vpop.f32.mrb[0].mxu0
  %v593 = vpop.f32.mrb[0].mxu0
  %v594 = vadd.f32 0.0, %v593
  %v595 = vpop.f32.mrb[0].mxu0
  %596 = vmatprep.mubr.bf16.mxu0 0
  %597 = vmatmul.mubr.bf16.gmra.mrb[0].mxu0 %v268
  %v598 = vpop.f32.mrb[0].mxu0
  %v599 = vadd.f32 0.0, %v598
  %v600 = vpop.f32.mrb[0].mxu0
  %v601 = vpop.f32.mrb[0].mxu0
  %v602 = vadd.f32 0.0, %v601
  %v603 = vpop.f32.mrb[0].mxu0
  %604 = vmatprep.mubr.bf16.mxu0 0
  %605 = vmatmul.mubr.bf16.gmra.mrb[0].mxu0 %v271
  %v606 = vpop.f32.mrb[0].mxu0
  %v607 = vadd.f32 0.0, %v606
  %v608 = vpop.f32.mrb[0].mxu0
  %v609 = vpop.f32.mrb[0].mxu0
  %v610 = vadd.f32 0.0, %v609
  %v611 = vpop.f32.mrb[0].mxu0
  %612 = vmatprep.mubr.bf16.mxu0 0
  %613 = vmatmul.mubr.bf16.gmra.mrb[0].mxu0 %v274
  %v614 = vpop.f32.mrb[0].mxu0
  %v615 = vadd.f32 0.0, %v614
  %v616 = vpop.f32.mrb[0].mxu0
  %v617 = vpop.f32.mrb[0].mxu0
  %v618 = vadd.f32 0.0, %v617
  %v619 = vpop.f32.mrb[0].mxu0
  %620 = vdwg.mxu0
  %v621 = vmul.f32 %v591, %v29
  %v622 = vmul.f32 %v594, %v30
  %v623 = vmul.f32 %v599, %v31
  %v624 = vmul.f32 %v602, %v32
  %v625 = vmul.f32 %v607, %v33
  %v626 = vmul.f32 %v610, %v34
  %v627 = vmul.f32 %v615, %v35
  %v628 = vmul.f32 %v618, %v36
  %v629 = vadd.f32 %v621, %v516
  %v630 = vadd.f32 %v622, %v520
  %v631 = vadd.f32 %v623, %v526
  %v632 = vadd.f32 %v624, %v530
  %v633 = vadd.f32 %v625, %v536
  %v634 = vadd.f32 %v626, %v540
  %v635 = vadd.f32 %v627, %v546
  %v636 = vadd.f32 %v628, %v550
  %v637 = vlaneseq
  %v638 = vshrl.u32 %v637, 7
  %v639 = vsub.s32 0, %v638
  %v640 = vrot.slane %v398, %v639
  %v641 = vadd.f32 %v629, %v640
  %v642 = vadd.f32 %v630, %v640
  %v643 = vadd.f32 %v631, %v640
  %v644 = vadd.f32 %v632, %v640
  %v645 = vadd.f32 %v633, %v640
  %v646 = vadd.f32 %v634, %v640
  %v647 = vadd.f32 %v635, %v640
  %v648 = vadd.f32 %v636, %v640
  %v649 = vmax.f32 %v641, 0.0
  %v650 = vmax.f32 %v642, 0.0
  %v651 = vmax.f32 %v643, 0.0
  %v652 = vmax.f32 %v644, 0.0
  %v653 = vmax.f32 %v645, 0.0
  %v654 = vmax.f32 %v646, 0.0
  %v655 = vmax.f32 %v647, 0.0
  %v656 = vmax.f32 %v648, 0.0
  %v657 = vpack.c.bf16 %v650, %v649
  %v658 = vpack.c.bf16 %v652, %v651
  %v659 = vpack.c.bf16 %v654, %v653
  %v660 = vpack.c.bf16 %v656, %v655
  %s661 = scalar_lea.vmem %s3, 256
  %v662 = vld [vmem:[%s661] sm:$0xff]
  %v663 = vld [vmem:[%s661 + $0x8] sm:$0xff]
  %v664 = vld [vmem:[%s661 + $0x10] sm:$0xff]
  %v665 = vld [vmem:[%s661 + $0x18] sm:$0xff]
  %v666 = vld [vmem:[%s661 + $0x20] sm:$0xff]
  %v667 = vld [vmem:[%s661 + $0x28] sm:$0xff]
  %v668 = vld [vmem:[%s661 + $0x30] sm:$0xff]
  %v669 = vld [vmem:[%s661 + $0x38] sm:$0xff]
  %v670 = vld [vmem:[%s661 + $0x40] sm:$0xff]
  %v671 = vld [vmem:[%s661 + $0x48] sm:$0xff]
  %v672 = vld [vmem:[%s661 + $0x50] sm:$0xff]
  %v673 = vld [vmem:[%s661 + $0x58] sm:$0xff]
  %v674 = vld [vmem:[%s661 + $0x60] sm:$0xff]
  %v675 = vld [vmem:[%s661 + $0x68] sm:$0xff]
  %v676 = vld [vmem:[%s661 + $0x70] sm:$0xff]
  %v677 = vld [vmem:[%s661 + $0x78] sm:$0xff]
  %v678 = vld [vmem:[%s4 + $0x2] sm:$0x1]
  %v695 = vunpack.c.l.b16 %v662
  %v696 = vunpack.c.h.b16 %v662
  %v697 = vunpack.c.l.b16 %v663
  %v698 = vunpack.c.h.b16 %v663
  %v699 = vunpack.c.l.b16 %v664
  %v700 = vunpack.c.h.b16 %v664
  %v701 = vunpack.c.l.b16 %v665
  %v702 = vunpack.c.h.b16 %v665
  %v703 = vunpack.c.l.b16 %v666
  %v704 = vunpack.c.h.b16 %v666
  %v705 = vunpack.c.l.b16 %v667
  %v706 = vunpack.c.h.b16 %v667
  %v707 = vunpack.c.l.b16 %v668
  %v708 = vunpack.c.h.b16 %v668
  %v709 = vunpack.c.l.b16 %v669
  %v710 = vunpack.c.h.b16 %v669
  %v711 = vunpack.c.l.b16 %v670
  %v712 = vunpack.c.h.b16 %v670
  %v713 = vunpack.c.l.b16 %v671
  %v714 = vunpack.c.h.b16 %v671
  %v715 = vunpack.c.l.b16 %v672
  %v716 = vunpack.c.h.b16 %v672
  %v717 = vunpack.c.l.b16 %v673
  %v718 = vunpack.c.h.b16 %v673
  %v719 = vunpack.c.l.b16 %v674
  %v720 = vunpack.c.h.b16 %v674
  %v721 = vunpack.c.l.b16 %v675
  %v722 = vunpack.c.h.b16 %v675
  %v723 = vunpack.c.l.b16 %v676
  %v724 = vunpack.c.h.b16 %v676
  %v725 = vunpack.c.l.b16 %v677
  %v726 = vunpack.c.h.b16 %v677
  %v727 = vpack.c.b16 %v697, %v695
  %v728 = vpack.c.b16 %v698, %v696
  %v729 = vpack.c.b16 %v701, %v699
  %v730 = vpack.c.b16 %v702, %v700
  %v731 = vpack.c.b16 %v705, %v703
  %v732 = vpack.c.b16 %v706, %v704
  %v733 = vpack.c.b16 %v709, %v707
  %v734 = vpack.c.b16 %v710, %v708
  %v735 = vpack.c.b16 %v713, %v711
  %v736 = vpack.c.b16 %v714, %v712
  %v737 = vpack.c.b16 %v717, %v715
  %v738 = vpack.c.b16 %v718, %v716
  %v739 = vpack.c.b16 %v721, %v719
  %v740 = vpack.c.b16 %v722, %v720
  %v741 = vpack.c.b16 %v725, %v723
  %v742 = vpack.c.b16 %v726, %v724
  %759 = vmatprep.subr.bf16.mxu0 %v728
  %760 = vmatpush1.bf16.msra.mxu0 %v727
  %761 = vmatprep.subr.bf16.mxu0 %v730
  %762 = vmatpush1.bf16.msra.mxu0 %v729
  %763 = vmatprep.subr.bf16.mxu0 %v732
  %764 = vmatpush1.bf16.msra.mxu0 %v731
  %765 = vmatprep.subr.bf16.mxu0 %v734
  %766 = vmatpush1.bf16.msra.mxu0 %v733
  %767 = vmatprep.subr.bf16.mxu0 %v736
  %768 = vmatpush1.bf16.msra.mxu0 %v735
  %769 = vmatprep.subr.bf16.mxu0 %v738
  %770 = vmatpush1.bf16.msra.mxu0 %v737
  %771 = vmatprep.subr.bf16.mxu0 %v740
  %772 = vmatpush1.bf16.msra.mxu0 %v739
  %773 = vmatprep.subr.bf16.mxu0 %v742
  %774 = vmatpush1.bf16.msra.mxu0 %v741
  %775 = vmatprep.subr.bf16.mxu0 0
  %776 = vmatpush1.bf16.msra.mxu0 0
  %777 = vmatprep.subr.bf16.mxu0 0
  %778 = vmatpush1.bf16.msra.mxu0 0
  %779 = vmatprep.subr.bf16.mxu0 0
  %780 = vmatpush1.bf16.msra.mxu0 0
  %781 = vmatprep.subr.bf16.mxu0 0
  %782 = vmatpush1.bf16.msra.mxu0 0
  %783 = vmatprep.subr.bf16.mxu0 0
  %784 = vmatpush1.bf16.msra.mxu0 0
  %785 = vmatprep.subr.bf16.mxu0 0
  %786 = vmatpush1.bf16.msra.mxu0 0
  %787 = vmatprep.subr.bf16.mxu0 0
  %788 = vmatpush1.bf16.msra.mxu0 0
  %789 = vmatprep.subr.bf16.mxu0 0
  %790 = vmatpush1.bf16.msra.mxu0 0
  %791 = vmatprep.mubr.bf16.mxu0 0
  %792 = vmatmul.mubr.bf16.gmra.mrb[0].mxu0 %v657
  %v793 = vpop.f32.mrb[0].mxu0
  %v794 = vadd.f32 0.0, %v793
  %v795 = vpop.f32.mrb[0].mxu0
  %v796 = vadd.f32 0.0, %v795
  %v797 = vpop.f32.mrb[0].mxu0
  %v798 = vadd.f32 0.0, %v797
  %v799 = vpop.f32.mrb[0].mxu0
  %v800 = vadd.f32 0.0, %v799
  %801 = vmatprep.mubr.bf16.mxu0 0
  %802 = vmatmul.mubr.bf16.gmra.mrb[0].mxu0 %v658
  %v803 = vpop.f32.mrb[0].mxu0
  %v804 = vadd.f32 0.0, %v803
  %v805 = vpop.f32.mrb[0].mxu0
  %v806 = vadd.f32 0.0, %v805
  %v807 = vpop.f32.mrb[0].mxu0
  %v808 = vadd.f32 0.0, %v807
  %v809 = vpop.f32.mrb[0].mxu0
  %v810 = vadd.f32 0.0, %v809
  %811 = vmatprep.mubr.bf16.mxu0 0
  %812 = vmatmul.mubr.bf16.gmra.mrb[0].mxu0 %v659
  %v813 = vpop.f32.mrb[0].mxu0
  %v814 = vadd.f32 0.0, %v813
  %v815 = vpop.f32.mrb[0].mxu0
  %v816 = vadd.f32 0.0, %v815
  %v817 = vpop.f32.mrb[0].mxu0
  %v818 = vadd.f32 0.0, %v817
  %v819 = vpop.f32.mrb[0].mxu0
  %v820 = vadd.f32 0.0, %v819
  %821 = vmatprep.mubr.bf16.mxu0 0
  %822 = vmatmul.mubr.bf16.gmra.mrb[0].mxu0 %v660
  %v823 = vpop.f32.mrb[0].mxu0
  %v824 = vadd.f32 0.0, %v823
  %v825 = vpop.f32.mrb[0].mxu0
  %v826 = vadd.f32 0.0, %v825
  %v827 = vpop.f32.mrb[0].mxu0
  %v828 = vadd.f32 0.0, %v827
  %v829 = vpop.f32.mrb[0].mxu0
  %v830 = vadd.f32 0.0, %v829
  %831 = vdwg.mxu0
  %v832 = vpack.c.bf16 %v798, %v794
  %v833 = vpack.c.bf16 %v808, %v804
  %v834 = vpack.c.bf16 %v818, %v814
  %v835 = vpack.c.bf16 %v828, %v824
  %836 = vmatprep.subr.bf16.mxu0 0
  %837 = vmatpush1.bf16.msra.mxu0 %v832
  %838 = vmatprep.subr.bf16.mxu0 0
  %839 = vmatpush1.bf16.msra.mxu0 %v833
  %840 = vmatprep.subr.bf16.mxu0 0
  %841 = vmatpush1.bf16.msra.mxu0 %v834
  %842 = vmatprep.subr.bf16.mxu0 0
  %843 = vmatpush1.bf16.msra.mxu0 %v835
  %844 = vmatprep.subr.bf16.mxu0 0
  %845 = vmatpush1.bf16.msra.mxu0 0
  %846 = vmatprep.subr.bf16.mxu0 0
  %847 = vmatpush1.bf16.msra.mxu0 0
  %848 = vmatprep.subr.bf16.mxu0 0
  %849 = vmatpush1.bf16.msra.mxu0 0
  %850 = vmatprep.subr.bf16.mxu0 0
  %851 = vmatpush1.bf16.msra.mxu0 0
  %852 = vmatprep.subr.bf16.mxu0 0
  %853 = vmatpush1.bf16.msra.mxu0 0
  %854 = vmatprep.subr.bf16.mxu0 0
  %855 = vmatpush1.bf16.msra.mxu0 0
  %856 = vmatprep.subr.bf16.mxu0 0
  %857 = vmatpush1.bf16.msra.mxu0 0
  %858 = vmatprep.subr.bf16.mxu0 0
  %859 = vmatpush1.bf16.msra.mxu0 0
  %860 = vmatprep.subr.bf16.mxu0 0
  %861 = vmatpush1.bf16.msra.mxu0 0
  %862 = vmatprep.subr.bf16.mxu0 0
  %863 = vmatpush1.bf16.msra.mxu0 0
  %864 = vmatprep.subr.bf16.mxu0 0
  %865 = vmatpush1.bf16.msra.mxu0 0
  %866 = vmatprep.subr.bf16.mxu0 0
  %867 = vmatpush1.bf16.msra.mxu0 0
  %868 = vmatprep.mubr.bf16.mxu0 0
  %869 = vmatmul.mubr.bf16.gmra.mrb[0].mxu0 %v265
  %v870 = vpop.f32.mrb[0].mxu0
  %v871 = vadd.f32 0.0, %v870
  %v872 = vpop.f32.mrb[0].mxu0
  %v873 = vpop.f32.mrb[0].mxu0
  %v874 = vadd.f32 0.0, %v873
  %v875 = vpop.f32.mrb[0].mxu0
  %876 = vmatprep.mubr.bf16.mxu0 0
  %877 = vmatmul.mubr.bf16.gmra.mrb[0].mxu0 %v268
  %v878 = vpop.f32.mrb[0].mxu0
  %v879 = vadd.f32 0.0, %v878
  %v880 = vpop.f32.mrb[0].mxu0
  %v881 = vpop.f32.mrb[0].mxu0
  %v882 = vadd.f32 0.0, %v881
  %v883 = vpop.f32.mrb[0].mxu0
  %884 = vmatprep.mubr.bf16.mxu0 0
  %885 = vmatmul.mubr.bf16.gmra.mrb[0].mxu0 %v271
  %v886 = vpop.f32.mrb[0].mxu0
  %v887 = vadd.f32 0.0, %v886
  %v888 = vpop.f32.mrb[0].mxu0
  %v889 = vpop.f32.mrb[0].mxu0
  %v890 = vadd.f32 0.0, %v889
  %v891 = vpop.f32.mrb[0].mxu0
  %892 = vmatprep.mubr.bf16.mxu0 0
  %893 = vmatmul.mubr.bf16.gmra.mrb[0].mxu0 %v274
  %v894 = vpop.f32.mrb[0].mxu0
  %v895 = vadd.f32 0.0, %v894
  %v896 = vpop.f32.mrb[0].mxu0
  %v897 = vpop.f32.mrb[0].mxu0
  %v898 = vadd.f32 0.0, %v897
  %v899 = vpop.f32.mrb[0].mxu0
  %900 = vdwg.mxu0
  %v901 = vmul.f32 %v871, %v29
  %v902 = vmul.f32 %v874, %v30
  %v903 = vmul.f32 %v879, %v31
  %v904 = vmul.f32 %v882, %v32
  %v905 = vmul.f32 %v887, %v33
  %v906 = vmul.f32 %v890, %v34
  %v907 = vmul.f32 %v895, %v35
  %v908 = vmul.f32 %v898, %v36
  %v909 = vadd.f32 %v901, %v796
  %v910 = vadd.f32 %v902, %v800
  %v911 = vadd.f32 %v903, %v806
  %v912 = vadd.f32 %v904, %v810
  %v913 = vadd.f32 %v905, %v816
  %v914 = vadd.f32 %v906, %v820
  %v915 = vadd.f32 %v907, %v826
  %v916 = vadd.f32 %v908, %v830
  %v917 = vlaneseq
  %v918 = vshrl.u32 %v917, 7
  %v919 = vsub.s32 0, %v918
  %v920 = vrot.slane %v678, %v919
  %v921 = vadd.f32 %v909, %v920
  %v922 = vadd.f32 %v910, %v920
  %v923 = vadd.f32 %v911, %v920
  %v924 = vadd.f32 %v912, %v920
  %v925 = vadd.f32 %v913, %v920
  %v926 = vadd.f32 %v914, %v920
  %v927 = vadd.f32 %v915, %v920
  %v928 = vadd.f32 %v916, %v920
  %v929 = vlaneseq
  %v930 = vand.u32 %v929, 127
  %vm931 = vcmp.lt.s32.totalorder %v930, 8
  %v932 = vsel %vm931, %v921, -1e+30
  %v933 = vsel %vm931, %v922, -1e+30
  %v934 = vsel %vm931, %v923, -1e+30
  %v935 = vsel %vm931, %v924, -1e+30
  %v936 = vsel %vm931, %v925, -1e+30
  %v937 = vsel %vm931, %v926, -1e+30
  %v938 = vsel %vm931, %v927, -1e+30
  %v939 = vsel %vm931, %v928, -1e+30
  %940 = vmax.xlane.f32.xlu0 %v932
  %v941 = vpop.xlane.xlu0 %940
  %942 = vmax.xlane.f32.xlu0 %v933
  %v943 = vpop.xlane.xlu0 %942
  %944 = vmax.xlane.f32.xlu0 %v934
  %v945 = vpop.xlane.xlu0 %944
  %946 = vmax.xlane.f32.xlu0 %v935
  %v947 = vpop.xlane.xlu0 %946
  %948 = vmax.xlane.f32.xlu0 %v936
  %v949 = vpop.xlane.xlu0 %948
  %950 = vmax.xlane.f32.xlu0 %v937
  %v951 = vpop.xlane.xlu0 %950
  %952 = vmax.xlane.f32.xlu0 %v938
  %v953 = vpop.xlane.xlu0 %952
  %954 = vmax.xlane.f32.xlu0 %v939
  %v955 = vpop.xlane.xlu0 %954
  %v956 = vsub.f32 %v932, %v941
  %v957 = vsub.f32 %v933, %v943
  %v958 = vsub.f32 %v934, %v945
  %v959 = vsub.f32 %v935, %v947
  %v960 = vsub.f32 %v936, %v949
  %v961 = vsub.f32 %v937, %v951
  %v962 = vsub.f32 %v938, %v953
  %v963 = vsub.f32 %v939, %v955
  %v964 = vmul.f32 %v956, 1.442695
  %v965 = vpow.pop %v964
  %v966 = vmul.f32 %v957, 1.442695
  %v967 = vpow.pop %v966
  %v968 = vmul.f32 %v958, 1.442695
  %v969 = vpow.pop %v968
  %v970 = vmul.f32 %v959, 1.442695
  %v971 = vpow.pop %v970
  %v972 = vmul.f32 %v960, 1.442695
  %v973 = vpow.pop %v972
  %v974 = vmul.f32 %v961, 1.442695
  %v975 = vpow.pop %v974
  %v976 = vmul.f32 %v962, 1.442695
  %v977 = vpow.pop %v976
  %v978 = vmul.f32 %v963, 1.442695
  %v979 = vpow.pop %v978
  %980 = vadd.xlane.f32.xlu0 %v965
  %v981 = vpop.xlane.xlu0 %980
  %982 = vadd.xlane.f32.xlu0 %v967
  %v983 = vpop.xlane.xlu0 %982
  %984 = vadd.xlane.f32.xlu0 %v969
  %v985 = vpop.xlane.xlu0 %984
  %986 = vadd.xlane.f32.xlu0 %v971
  %v987 = vpop.xlane.xlu0 %986
  %988 = vadd.xlane.f32.xlu0 %v973
  %v989 = vpop.xlane.xlu0 %988
  %990 = vadd.xlane.f32.xlu0 %v975
  %v991 = vpop.xlane.xlu0 %990
  %992 = vadd.xlane.f32.xlu0 %v977
  %v993 = vpop.xlane.xlu0 %992
  %994 = vadd.xlane.f32.xlu0 %v979
  %v995 = vpop.xlane.xlu0 %994
  %v996 = vlog2.pop %v981
  %v997 = vmul.f32 %v996, 0.6931472
  %v998 = vlog2.pop %v983
  %v999 = vmul.f32 %v998, 0.6931472
  %v1000 = vlog2.pop %v985
  %v1001 = vmul.f32 %v1000, 0.6931472
  %v1002 = vlog2.pop %v987
  %v1003 = vmul.f32 %v1002, 0.6931472
  %v1004 = vlog2.pop %v989
  %v1005 = vmul.f32 %v1004, 0.6931472
  %v1006 = vlog2.pop %v991
  %v1007 = vmul.f32 %v1006, 0.6931472
  %v1008 = vlog2.pop %v993
  %v1009 = vmul.f32 %v1008, 0.6931472
  %v1010 = vlog2.pop %v995
  %v1011 = vmul.f32 %v1010, 0.6931472
  %v1012 = vadd.f32 %v997, %v941
  %v1013 = vadd.f32 %v999, %v943
  %v1014 = vadd.f32 %v1001, %v945
  %v1015 = vadd.f32 %v1003, %v947
  %v1016 = vadd.f32 %v1005, %v949
  %v1017 = vadd.f32 %v1007, %v951
  %v1018 = vadd.f32 %v1009, %v953
  %v1019 = vadd.f32 %v1011, %v955
  %v1020 = vsub.f32 %v932, %v1012
  %v1021 = vsub.f32 %v933, %v1013
  %v1022 = vsub.f32 %v934, %v1014
  %v1023 = vsub.f32 %v935, %v1015
  %v1024 = vsub.f32 %v936, %v1016
  %v1025 = vsub.f32 %v937, %v1017
  %v1026 = vsub.f32 %v938, %v1018
  %v1027 = vsub.f32 %v939, %v1019
  %1028 = vst [vmem:[%s5] sm:$0xff] %v1020
  %1029 = vst [vmem:[%s5 + $0x8] sm:$0xff] %v1021
  %1030 = vst [vmem:[%s5 + $0x10] sm:$0xff] %v1022
  %1031 = vst [vmem:[%s5 + $0x18] sm:$0xff] %v1023
  %1032 = vst [vmem:[%s5 + $0x20] sm:$0xff] %v1024
  %1033 = vst [vmem:[%s5 + $0x28] sm:$0xff] %v1025
  %1034 = vst [vmem:[%s5 + $0x30] sm:$0xff] %v1026
  %1035 = vst [vmem:[%s5 + $0x38] sm:$0xff] %v1027
  // Predicated region
  $region22: #{sage_forward_pallas.1} parent=0 // pred_check
    _
  $region23: #{sage_forward_pallas.1} parent=0 // pred_check_branch
    %1037 = sbr.rel (0) target = $region25
  $region24: #{sage_forward_pallas.1} parent=0 // pred_region
    _
  $region25: #{sage_forward_pallas.1} parent=0 // pred_fallthru
    _
  // Predicated region
  $region26: #{sage_forward_pallas.1} parent=0 // pred_check
    _
  $region27: #{sage_forward_pallas.1} parent=0 // pred_check_branch
    %1039 = sbr.rel (0) target = $region29
  $region28: #{sage_forward_pallas.1} parent=0 // pred_region
    _
  $region29: #{sage_forward_pallas.1} parent=0 // pred_fallthru
    _

</llo_original>
